<compile_context>
chip_gen: v7x
topology: tpu7x:2x2x1
jax: 0.10.0
libtpu: 0.0.40
codegen_flags: <defaults>
</compile_context>

<pallas_src>
import functools

import jax
import jax.numpy as jnp
from jax.experimental import pallas as pl
from jax.experimental.pallas import tpu as pltpu


def _round_up(x: int, m: int) -> int:
    return ((x + m - 1) // m) * m


def _choose_tile_b(B: int, D: int, K_pad: int,
                   budget_bytes: int = 24 * 1024 * 1024,
                   tb_max: int = 1024) -> int:
    """Largest batch tile (multiple of 8, <= tb_max) whose double-buffered
    VMEM footprint fits the budget on all TPU generations."""
    tb = min(tb_max, _round_up(max(B, 1), 8))
    while tb > 8:
        # x tile + weights + w2 + out tile, all assumed double-buffered (f32).
        footprint = 2 * (tb * D + K_pad * D + K_pad + tb * K_pad) * 4
        if footprint <= budget_bytes:
            break
        tb //= 2
    return max(tb, 8)


def _clustering_kernel(x_ref, w_ref, w2_ref, q_ref, *, n_clusters: int,
                       matmul_in_bf16: bool):
    # x_ref: (TB, D), w_ref: (K_pad, D), w2_ref: (1, K_pad), q_ref: (TB, K_pad)
    x = x_ref[...].astype(jnp.float32)

    # ||x||^2 per row (f32 for accuracy).
    x2 = jnp.sum(x * x, axis=-1, keepdims=True)                       # (TB, 1)

    # -2 * x @ w^T on the MXU (optionally bf16 inputs, f32 accumulation).
    if matmul_in_bf16:
        xd = x.astype(jnp.bfloat16)
        wd = w_ref[...].astype(jnp.bfloat16)
    else:
        xd = x
        wd = w_ref[...].astype(jnp.float32)
    xw = jnp.dot(xd, wd.T, preferred_element_type=jnp.float32)        # (TB, K_pad)

    # Pairwise squared distances; clamp tiny negatives from cancellation.
    dist = x2 + w2_ref[...] - 2.0 * xw
    dist = jnp.maximum(dist, 0.0)

    # Student-t kernel (alpha = 1) via EUP approximate reciprocal.
    q = pl.reciprocal(1.0 + dist, approx=True)

    # Zero out padded cluster columns before normalization.
    k_pad = q.shape[-1]
    if n_clusters < k_pad:
        col = jax.lax.broadcasted_iota(jnp.int32, q.shape, 1)
        q = jnp.where(col < n_clusters, q, 0.0)

    # Exact row normalization (rows must sum to 1 tightly).
    denom = jnp.sum(q, axis=-1, keepdims=True)
    q = q * (1.0 / denom)

    q_ref[...] = q.astype(q_ref.dtype)


def clustering_layer(x: jax.Array, weights: jax.Array, *,
                     matmul_in_bf16: bool = False) -> jax.Array:
    """x: (B, D), weights: (K, D) -> q: (B, K) soft assignments."""
    B, D = x.shape
    K, D2 = weights.shape
    assert D == D2, "feature dims must match"

    # Lane-dense output: pad K up to a multiple of 128.
    K_pad = _round_up(K, 128)
    TB = _choose_tile_b(B, D, K_pad)
    B_pad = pl.cdiv(B, TB) * TB
    grid = (B_pad // TB,)

    x_p = x.astype(jnp.float32)
    if B_pad != B:
        x_p = jnp.pad(x_p, ((0, B_pad - B), (0, 0)))
    w_p = weights.astype(jnp.float32)
    if K_pad != K:
        w_p = jnp.pad(w_p, ((0, K_pad - K), (0, 0)))

    # One-time ||w||^2 (hoisted out of the per-tile steady-state loop).
    w2 = jnp.sum(w_p * w_p, axis=-1, keepdims=True).T                 # (1, K_pad)

    kernel = functools.partial(_clustering_kernel, n_clusters=K,
                               matmul_in_bf16=matmul_in_bf16)

    q_pad = pl.pallas_call(
        kernel,
        out_shape=jax.ShapeDtypeStruct((B_pad, K_pad), jnp.float32),
        grid=grid,
        in_specs=[
            pl.BlockSpec((TB, D), lambda i: (i, 0)),        # streamed x tiles
            pl.BlockSpec((K_pad, D), lambda i: (0, 0)),     # resident weights
            pl.BlockSpec((1, K_pad), lambda i: (0, 0)),     # resident ||w||^2
        ],
        out_specs=pl.BlockSpec((TB, K_pad), lambda i: (i, 0)),
        compiler_params=pltpu.CompilerParams(
            dimension_semantics=("parallel",),              # dual-TC on v7x
            vmem_limit_bytes=32 * 1024 * 1024,
        ),
    )(x_p, w_p, w2)

    return q_pad[:B, :K]


def xavier_normal(key, n_clusters: int, input_dim: int) -> jax.Array:
    # nn.init.xavier_normal_: std = gain * sqrt(2 / (fan_in + fan_out))
    std = (2.0 / (n_clusters + input_dim)) ** 0.5
    return std * jax.random.normal(key, (n_clusters, input_dim), dtype=jnp.float32)


if __name__ == "__main__":
    key = jax.random.PRNGKey(0)
    k_x, k_w = jax.random.split(key)

    B, D, K = 8, 32, 10  # batch, embedding dim (input_dim), n_clusters

    x = jax.random.normal(k_x, (B, D), dtype=jnp.float32)
    weights = xavier_normal(k_w, K, D)

    q = jax.block_until_ready(clustering_layer(x, weights))

    # Reference check in plain JAX (same math as the PyTorch forward).
    dist_ref = jnp.sum((x[:, None, :] - weights[None, :, :]) ** 2, axis=2)
    q_ref = 1.0 / (1.0 + dist_ref)
    q_ref = q_ref / jnp.sum(q_ref, axis=1, keepdims=True)

    assert q.shape == (B, K)
    # approx=True reciprocal on the Student-t kernel -> allow ~1e-3 tolerance.
    assert jnp.allclose(q, q_ref, atol=1e-3, rtol=1e-3), "mismatch vs reference"
    # Normalization is exact: rows sum to 1 tightly.
    assert jnp.allclose(jnp.sum(q, axis=1), 1.0, atol=1e-5), "rows must sum to 1"

    print("KERNEL_OK")
</pallas_src>

<mosaic_0001>
module attributes {stable_mosaic.version = 11 : i64} {
  func.func @_clustering_kernel(%arg0: i32, %arg1: memref<8x32xf32, #tpu.memory_space<vmem>>, %arg2: memref<128x32xf32, #tpu.memory_space<vmem>>, %arg3: memref<1x128xf32, #tpu.memory_space<vmem>>, %arg4: memref<8x128xf32, #tpu.memory_space<vmem>>) attributes {dimension_semantics = [#tpu.dimension_semantics<parallel>], iteration_bounds = array<i64: 1>, scalar_prefetch = 0 : i64, scratch_operands = 0 : i64, tpu.core_type = #tpu.core_type<tc>, window_params = [{transform_indices = @transform_0, window_bounds = array<i64: 8, 32>}, {pipeline_mode = #tpu.pipeline_mode<synchronous>, transform_indices = @transform_1, window_bounds = array<i64: 128, 32>}, {pipeline_mode = #tpu.pipeline_mode<synchronous>, transform_indices = @transform_2, window_bounds = array<i64: 1, 128>}, {transform_indices = @transform_3, window_bounds = array<i64: 8, 128>}]} {
    %c0 = arith.constant 0 : index
    %c0_0 = arith.constant 0 : index
    %0 = vector.load %arg1[%c0, %c0_0] : memref<8x32xf32, #tpu.memory_space<vmem>>, vector<8x32xf32>
    %1 = arith.mulf %0, %0 : vector<8x32xf32>
    %cst = arith.constant dense<0.000000e+00> : vector<8xf32>
    %2 = vector.multi_reduction <add>, %1, %cst [1] : vector<8x32xf32> to vector<8xf32>
    %3 = vector.shape_cast %2 : vector<8xf32> to vector<8x1xf32>
    %c0_1 = arith.constant 0 : index
    %c0_2 = arith.constant 0 : index
    %4 = vector.load %arg2[%c0_1, %c0_2] : memref<128x32xf32, #tpu.memory_space<vmem>>, vector<128x32xf32>
    %5 = tpu.transpose %4, [1, 0] : vector<128x32xf32> -> vector<32x128xf32>
    %cst_3 = arith.constant dense<0.000000e+00> : vector<8x128xf32>
    %6 = tpu.matmul %0, %5, %cst_3 {dimension_numbers = #tpu.dot_dimension_numbers<[1], [0], [0], [1], [0, 0, 1, 1], [], []>} : vector<8x32xf32>, vector<32x128xf32>, vector<8x128xf32> -> vector<8x128xf32>
    %c0_4 = arith.constant 0 : index
    %c0_5 = arith.constant 0 : index
    %7 = vector.load %arg3[%c0_4, %c0_5] : memref<1x128xf32, #tpu.memory_space<vmem>>, vector<1x128xf32>
    %8 = vector.broadcast %3 : vector<8x1xf32> to vector<8x128xf32>
    %9 = vector.broadcast %7 : vector<1x128xf32> to vector<8x128xf32>
    %10 = arith.addf %8, %9 : vector<8x128xf32>
    %cst_6 = arith.constant 2.000000e+00 : f32
    %11 = vector.broadcast %cst_6 : f32 to vector<8x128xf32>
    %12 = arith.mulf %11, %6 : vector<8x128xf32>
    %13 = arith.subf %10, %12 : vector<8x128xf32>
    %cst_7 = arith.constant 0.000000e+00 : f32
    %14 = vector.broadcast %cst_7 : f32 to vector<8x128xf32>
    %15 = arith.maximumf %13, %14 : vector<8x128xf32>
    %cst_8 = arith.constant 1.000000e+00 : f32
    %16 = vector.broadcast %cst_8 : f32 to vector<8x128xf32>
    %17 = arith.addf %16, %15 : vector<8x128xf32>
    %18 = tpu.reciprocal %17 {approx = true} : vector<8x128xf32> -> vector<8x128xf32>
    %19 = tpu.iota {dimensions = array<i32: 1>} : vector<8x128xi32>
    %c10_i32 = arith.constant 10 : i32
    %20 = vector.broadcast %c10_i32 : i32 to vector<8x128xi32>
    %21 = arith.cmpi slt, %19, %20 : vector<8x128xi32>
    %cst_9 = arith.constant 0.000000e+00 : f32
    %22 = vector.broadcast %cst_9 : f32 to vector<8x128xf32>
    %23 = arith.select %21, %18, %22 : vector<8x128xi1>, vector<8x128xf32>
    %cst_10 = arith.constant dense<0.000000e+00> : vector<8xf32>
    %24 = vector.multi_reduction <add>, %23, %cst_10 [1] : vector<8x128xf32> to vector<8xf32>
    %25 = vector.shape_cast %24 : vector<8xf32> to vector<8x1xf32>
    %cst_11 = arith.constant 1.000000e+00 : f32
    %26 = vector.broadcast %cst_11 : f32 to vector<8x1xf32>
    %27 = arith.divf %26, %25 : vector<8x1xf32>
    %28 = vector.broadcast %27 : vector<8x1xf32> to vector<8x128xf32>
    %29 = arith.mulf %23, %28 : vector<8x128xf32>
    %c0_12 = arith.constant 0 : index
    %c0_13 = arith.constant 0 : index
    %30 = vector.load %arg4[%c0_12, %c0_13] : memref<8x128xf32, #tpu.memory_space<vmem>>, vector<8x128xf32>
    tpu.vector_store %arg4[%c0_12, %c0_13], %29 {strides = array<i32>} : memref<8x128xf32, #tpu.memory_space<vmem>>, vector<8x128xf32>,
    return
  }
  func.func @transform_0(%arg0: i32) -> (i32, i32) {
    %c0_i32 = arith.constant 0 : i32
    %c0_i32_0 = arith.constant 0 : i32
    return %arg0, %c0_i32 : i32, i32
  }
  func.func @transform_1(%arg0: i32) -> (i32, i32) {
    %c0_i32 = arith.constant 0 : i32
    %c0_i32_0 = arith.constant 0 : i32
    %c0_i32_1 = arith.constant 0 : i32
    return %c0_i32, %c0_i32_0 : i32, i32
  }
  func.func @transform_2(%arg0: i32) -> (i32, i32) {
    %c0_i32 = arith.constant 0 : i32
    %c0_i32_0 = arith.constant 0 : i32
    %c0_i32_1 = arith.constant 0 : i32
    return %c0_i32, %c0_i32_0 : i32, i32
  }
  func.func @transform_3(%arg0: i32) -> (i32, i32) {
    %c0_i32 = arith.constant 0 : i32
    %c0_i32_0 = arith.constant 0 : i32
    return %arg0, %c0_i32 : i32, i32
  }
}

</mosaic_0001>

<llo_original>
// kernel: tpu_custom_call.1
$region0: #{tpu_custom_call.1}
  #allocation0 [shape = 'u32[]', space=smem, size = 0x4, offset = 0x4, fixed_abs, tag = 'smem constant byte address 0x4 - core index']
  #allocation1 [shape = 'u32[144,128]{1,0:T(1,128)}', space=vmem, size = 0x12000, scoped, tag = 'internal scratch']
  %s0 = inlined_call_operand.vmem [shape: f32[8,32], index: 0, kind: input, shape index: {}]
  %s1 = inlined_call_operand.vmem [shape: f32[128,32], index: 1, kind: input, shape index: {}]
  %s2 = inlined_call_operand.vmem [shape: f32[1,128], index: 2, kind: input, shape index: {}]
  %s3 = inlined_call_operand.hbm [shape: f32[8,128], index: 3, kind: output, shape index: {}]
  %s4 = sld [smem:[#allocation0]]
  $region22: #{tpu_custom_call.1} parent=0
    _
  %s6 = ssub.s32 1, %s4
  %s7 = scalar_select 0, %s6, %s4
  $region1: #{tpu_custom_call.1} parent=0
    #allocation2 [shape = 'u8[4096]{0}', space=vmem, size = 0x1000, scoped, tag = 'output window, operand 0, single buffered']
    #allocation3 [shape = 's32[1]{0}', space=sflag, size = 0x4, scoped, tag = 'scoped memory for tpu_custom_call.1']
    %8 = vsyncpa [#allocation3], 0
    // Predicated region
    $region2: #{tpu_custom_call.1} parent=1 // pred_check
      _
    $region3: #{tpu_custom_call.1} parent=1 // pred_check_branch
      %10 = sbr.rel (0) target = $region5
    $region4: #{tpu_custom_call.1} parent=1 // pred_region
      _
    $region5: #{tpu_custom_call.1} parent=1 // pred_fallthru
      _
    // Predicated region
    $region6: #{tpu_custom_call.1} parent=1 // pred_check
      _
    $region7: #{tpu_custom_call.1} parent=1 // pred_check_branch
      %12 = sbr.rel (0) target = $region9
    $region8: #{tpu_custom_call.1} parent=1 // pred_region
      _
    $region9: #{tpu_custom_call.1} parent=1 // pred_fallthru
      _
    // Predicated region
    $region10: #{tpu_custom_call.1} parent=1 // pred_check
      _
    $region11: #{tpu_custom_call.1} parent=1 // pred_check_branch
      %14 = sbr.rel (0) target = $region13
    $region12: #{tpu_custom_call.1} parent=1 // pred_region
      _
    $region13: #{tpu_custom_call.1} parent=1 // pred_fallthru
      _
    %v15 = vld [vmem:[%s0] sm:$0xff]
    %v16 = vmul.f32 %v15, %v15
    %vm17 = vcmask 261120
    %v18 = vsel %vm17, %v16, 0.0
    %19 = vadd.xlane.f32.xlu0 %v18
    %v20 = vpop.xlane.xlu0 %19
    %v21 = vld [vmem:[%s1] sm:$0xff]
    %v22 = vld [vmem:[%s1 + $0x8] sm:$0xff]
    %v23 = vld [vmem:[%s1 + $0x10] sm:$0xff]
    %v24 = vld [vmem:[%s1 + $0x18] sm:$0xff]
    %v25 = vld [vmem:[%s1 + $0x20] sm:$0xff]
    %v26 = vld [vmem:[%s1 + $0x28] sm:$0xff]
    %v27 = vld [vmem:[%s1 + $0x30] sm:$0xff]
    %v28 = vld [vmem:[%s1 + $0x38] sm:$0xff]
    %v29 = vld [vmem:[%s1 + $0x40] sm:$0xff]
    %v30 = vld [vmem:[%s1 + $0x48] sm:$0xff]
    %v31 = vld [vmem:[%s1 + $0x50] sm:$0xff]
    %v32 = vld [vmem:[%s1 + $0x58] sm:$0xff]
    %v33 = vld [vmem:[%s1 + $0x60] sm:$0xff]
    %v34 = vld [vmem:[%s1 + $0x68] sm:$0xff]
    %v35 = vld [vmem:[%s1 + $0x70] sm:$0xff]
    %v36 = vld [vmem:[%s1 + $0x78] sm:$0xff]
    %v38 = vsel %vm17, %v15, 0
    %v41 = vsel %vm17, %v21, 0
    %v44 = vsel %vm17, %v22, 0
    %v47 = vsel %vm17, %v23, 0
    %v50 = vsel %vm17, %v24, 0
    %v53 = vsel %vm17, %v25, 0
    %v56 = vsel %vm17, %v26, 0
    %v59 = vsel %vm17, %v27, 0
    %v62 = vsel %vm17, %v28, 0
    %v65 = vsel %vm17, %v29, 0
    %v68 = vsel %vm17, %v30, 0
    %v71 = vsel %vm17, %v31, 0
    %v74 = vsel %vm17, %v32, 0
    %v77 = vsel %vm17, %v33, 0
    %v80 = vsel %vm17, %v34, 0
    %v83 = vsel %vm17, %v35, 0
    %v86 = vsel %vm17, %v36, 0
    %88 = vmatprep.subr.mxu0 0.0
    %89 = vmatpush1.xpose.msra.mxu0 %v41
    %90 = vmatprep.subr.mxu0 0.0
    %91 = vmatpush1.xpose.msra.mxu0 %v44
    %92 = vmatprep.subr.mxu0 0.0
    %93 = vmatpush1.xpose.msra.mxu0 %v47
    %94 = vmatprep.subr.mxu0 0.0
    %95 = vmatpush1.xpose.msra.mxu0 %v50
    %96 = vmatprep.subr.mxu0 0.0
    %97 = vmatpush1.xpose.msra.mxu0 %v53
    %98 = vmatprep.subr.mxu0 0.0
    %99 = vmatpush1.xpose.msra.mxu0 %v56
    %100 = vmatprep.subr.mxu0 0.0
    %101 = vmatpush1.xpose.msra.mxu0 %v59
    %102 = vmatprep.subr.mxu0 0.0
    %103 = vmatpush1.xpose.msra.mxu0 %v62
    %104 = vmatprep.subr.mxu0 0.0
    %105 = vmatpush1.xpose.msra.mxu0 %v65
    %106 = vmatprep.subr.mxu0 0.0
    %107 = vmatpush1.xpose.msra.mxu0 %v68
    %108 = vmatprep.subr.mxu0 0.0
    %109 = vmatpush1.xpose.msra.mxu0 %v71
    %110 = vmatprep.subr.mxu0 0.0
    %111 = vmatpush1.xpose.msra.mxu0 %v74
    %112 = vmatprep.subr.mxu0 0.0
    %113 = vmatpush1.xpose.msra.mxu0 %v77
    %114 = vmatprep.subr.mxu0 0.0
    %115 = vmatpush1.xpose.msra.mxu0 %v80
    %116 = vmatprep.subr.mxu0 0.0
    %117 = vmatpush1.xpose.msra.mxu0 %v83
    %118 = vmatprep.subr.mxu0 0.0
    %119 = vmatpush1.xpose.msra.mxu0 %v86
    %120 = vmatprep.subr.mxu0 0.0
    %121 = vmatpush1.xpose.msra.mxu0 0.0
    %122 = vmatprep.subr.mxu0 0.0
    %123 = vmatpush1.xpose.msra.mxu0 0.0
    %124 = vmatprep.subr.mxu0 0.0
    %125 = vmatpush1.xpose.msra.mxu0 0.0
    %126 = vmatprep.subr.mxu0 0.0
    %127 = vmatpush1.xpose.msra.mxu0 0.0
    %128 = vmatprep.subr.mxu0 0.0
    %129 = vmatpush1.xpose.msra.mxu0 0.0
    %130 = vmatprep.subr.mxu0 0.0
    %131 = vmatpush1.xpose.msra.mxu0 0.0
    %132 = vmatprep.subr.mxu0 0.0
    %133 = vmatpush1.xpose.msra.mxu0 0.0
    %134 = vmatprep.subr.mxu0 0.0
    %135 = vmatpush1.xpose.msra.mxu0 0.0
    %136 = vmatprep.subr.mxu0 0.0
    %137 = vmatpush1.xpose.msra.mxu0 0.0
    %138 = vmatprep.subr.mxu0 0.0
    %139 = vmatpush1.xpose.msra.mxu0 0.0
    %140 = vmatprep.subr.mxu0 0.0
    %141 = vmatpush1.xpose.msra.mxu0 0.0
    %142 = vmatprep.subr.mxu0 0.0
    %143 = vmatpush1.xpose.msra.mxu0 0.0
    %144 = vmatprep.subr.mxu0 0.0
    %145 = vmatpush1.xpose.msra.mxu0 0.0
    %146 = vmatprep.subr.mxu0 0.0
    %147 = vmatpush1.xpose.msra.mxu0 0.0
    %148 = vmatprep.subr.mxu0 0.0
    %149 = vmatpush1.xpose.msra.mxu0 0.0
    %150 = vmatprep.subr.mxu0 0.0
    %151 = vmatpush1.xpose.msra.mxu0 0.0
    %152 = vmatprep.mubr.f32.mxu0 0.0
    %153 = vmatmul.mubr.f32.gmra.mrb[0].mxu0 %v38
    %v154 = vpop.f32.mrb[0].mxu0
    %v155 = vadd.f32 0.0, %v154
    %v156 = vpop.f32.mrb[0].mxu0
    %157 = vdwg.mxu0
    %v158 = vld [vmem:[%s2] sm:$0x1]
    %v160 = vlaneseq
    %v161 = vshrl.u32 %v160, 7
    %v162 = vsub.s32 0, %v161
    %v163 = vrot.slane %v158, %v162
    %v165 = vadd.f32 %v20, %v163
    %v166 = vmul.f32 %v155, 2.0
    %v167 = vsub.f32 %v165, %v166
    %v168 = vmax.f32 %v167, 0.0
    %v169 = vadd.f32 %v168, 1.0
    %v170 = vrcp.pop %v169
    %v171 = vlaneseq
    %v172 = vand.u32 %v171, 127
    %vm173 = vcmp.lt.s32.totalorder %v172, 10
    %v174 = vsel %vm173, %v170, 0.0
    %175 = vadd.xlane.f32.xlu0 %v174
    %v176 = vpop.xlane.xlu0 %175
    %v177 = vrcp.pop %v176
    %v178 = vmul.f32 1.0, %v177
    %v179 = vmul.f32 %v174, %v178
    %180 = vst [vmem:[#allocation2] sm:$0xff] %v179
    // Predicated region
    $region14: #{tpu_custom_call.1} parent=1 // pred_check
      _
    $region15: #{tpu_custom_call.1} parent=1 // pred_check_branch
      %182 = sbr.rel (0) target = $region17
    $region16: #{tpu_custom_call.1} parent=1 // pred_region
      %s184 = ssub.s32 128, 128
      %185 = vsyncadd [#allocation3], %s184
      %s187 = sshll.u32 [#allocation2], 4
      %s188 = int_to_ptr.vmem [resolvable:$true] %s187
      %190 = dma.vmem_to_hbm [thread:$0]  %s188, 128, %s3, [#allocation3]
    $region17: #{tpu_custom_call.1} parent=1 // pred_fallthru
      _
    // Predicated region
    $region18: #{tpu_custom_call.1} parent=1 // pred_check
      _
    $region19: #{tpu_custom_call.1} parent=1 // pred_check_branch
      %192 = sbr.rel (0) target = $region21
    $region20: #{tpu_custom_call.1} parent=1 // pred_region
      %193 = dma.done [#allocation3], 128
    $region21: #{tpu_custom_call.1} parent=1 // pred_fallthru
      _
    %194 = vsyncpa [#allocation3], 1

</llo_original>
